<compile_context>
chip_gen: v7x
topology: tpu7x:2x2x1
jax: 0.10.0
libtpu: 0.0.40
codegen_flags: <defaults>
</compile_context>

<pallas_src>
import jax
import jax.numpy as jnp
from jax import lax
from jax.experimental import pallas as pl
from jax.experimental.pallas import tpu as pltpu


def _round_up(n, m):
    return ((n + m - 1) // m) * m


# ----------------------------------------------------------------------------
# Kernel: rows of (already reversed + flattened) char ids -> embedding rows.
# Gather is done as a one-hot matmul on the MXU:  (tn, V) @ (V, D).
# ----------------------------------------------------------------------------
def _char2vec_gather_kernel(ids_ref,    # (tn, 1)  int32 char ids (reversed order)
                            table_ref,  # (V, D)   float32 char2vec table
                            out_ref):   # (tn, D)  float32 gathered vectors
    tn = ids_ref.shape[0]
    V = table_ref.shape[0]

    ids = ids_ref[...]                                            # (tn, 1)
    col = lax.broadcasted_iota(jnp.int32, (tn, V), 1)             # (tn, V)
    onehot = (ids == col).astype(jnp.float32)                     # exact 0/1
    out_ref[...] = jnp.dot(onehot, table_ref[...],
                           preferred_element_type=jnp.float32)


# ----------------------------------------------------------------------------
# Wrapper
# ----------------------------------------------------------------------------
def char_to_vector_forward(x, char2vec, row_block=512):
    """x: (B, T, F) int char ids; char2vec: (V, D) float32 -> (B, T, F, D)."""
    B, T, F = x.shape
    V, D = char2vec.shape
    N = B * T * F

    # Index glue: `for f in reversed(feature_item)` == flip along last axis,
    # then flatten to one row per looked-up character.
    ids = jnp.flip(x.astype(jnp.int32), axis=-1).reshape(N, 1)

    # Row tile: multiple of 8 (sublane); single tile at small N.
    tn = min(row_block, _round_up(N, 8))
    n_pad = _round_up(N, tn)
    if n_pad != N:
        ids = jnp.pad(ids, ((0, n_pad - N), (0, 0)))  # pad rows gather id 0, discarded

    out = pl.pallas_call(
        _char2vec_gather_kernel,
        out_shape=jax.ShapeDtypeStruct((n_pad, D), jnp.float32),
        grid_spec=pltpu.PrefetchScalarGridSpec(
            num_scalar_prefetch=0,
            grid=(n_pad // tn,),                 # == 1 at the test shape
            in_specs=[
                pl.BlockSpec((tn, 1), lambda i: (i, 0)),   # row tile of ids
                pl.BlockSpec((V, D), lambda i: (0, 0)),    # full table, fetched once
            ],
            out_specs=pl.BlockSpec((tn, D), lambda i: (i, 0)),
        ),
        compiler_params=pltpu.CompilerParams(
            dimension_semantics=("parallel",)),  # rows independent -> v7x megacore
    )(ids, char2vec.astype(jnp.float32))

    return out[:N].reshape(B, T, F, D)


# ----------------------------------------------------------------------------
# Pure-JAX reference (mirrors the PyTorch nested loops) for correctness check.
# ----------------------------------------------------------------------------
def char_to_vector_reference(x, char2vec):
    return char2vec[jnp.flip(x, axis=-1)]          # (B, T, F, D)


if __name__ == "__main__":
    B, T, F = 2, 8, 10          # batch, timesteps, chars-per-timestep
    V, D = 64, 5                # vocab size, char2vec vector dim

    key = jax.random.PRNGKey(0)
    kx, kt = jax.random.split(key)
    x = jax.random.randint(kx, (B, T, F), 0, V, dtype=jnp.int32)
    char2vec = 0.1 * jax.random.normal(kt, (V, D), jnp.float32)

    out = jax.block_until_ready(char_to_vector_forward(x, char2vec))
    ref = char_to_vector_reference(x, char2vec)

    assert out.shape == (B, T, F, D), out.shape
    max_err = jnp.max(jnp.abs(out - ref))
    assert jnp.allclose(out, ref, atol=1e-3, rtol=1e-3), f"max abs err {max_err}"

    print("KERNEL_OK")
</pallas_src>

<mosaic_0001>
module attributes {stable_mosaic.version = 11 : i64} {
  func.func @_char2vec_gather_kernel(%arg0: i32, %arg1: memref<160x1xi32, #tpu.memory_space<vmem>>, %arg2: memref<64x5xf32, #tpu.memory_space<vmem>>, %arg3: memref<160x5xf32, #tpu.memory_space<vmem>>) attributes {dimension_semantics = [#tpu.dimension_semantics<parallel>], iteration_bounds = array<i64: 1>, scalar_prefetch = 0 : i64, scratch_operands = 0 : i64, tpu.core_type = #tpu.core_type<tc>, window_params = [{transform_indices = @transform_0, window_bounds = array<i64: 160, 1>}, {pipeline_mode = #tpu.pipeline_mode<synchronous>, transform_indices = @transform_1, window_bounds = array<i64: 64, 5>}, {transform_indices = @transform_2, window_bounds = array<i64: 160, 5>}]} {
    %c0 = arith.constant 0 : index
    %c0_0 = arith.constant 0 : index
    %0 = vector.load %arg1[%c0, %c0_0] : memref<160x1xi32, #tpu.memory_space<vmem>>, vector<160x1xi32>
    %1 = tpu.iota {dimensions = array<i32: 1>} : vector<160x64xi32>
    %2 = vector.broadcast %0 : vector<160x1xi32> to vector<160x64xi32>
    %3 = arith.cmpi eq, %2, %1 : vector<160x64xi32>
    %4 = arith.extui %3 : vector<160x64xi1> to vector<160x64xi32>
    %5 = arith.sitofp %4 : vector<160x64xi32> to vector<160x64xf32>
    %c0_1 = arith.constant 0 : index
    %c0_2 = arith.constant 0 : index
    %6 = vector.load %arg2[%c0_1, %c0_2] : memref<64x5xf32, #tpu.memory_space<vmem>>, vector<64x5xf32>
    %cst = arith.constant dense<0.000000e+00> : vector<160x5xf32>
    %7 = tpu.matmul %5, %6, %cst {dimension_numbers = #tpu.dot_dimension_numbers<[1], [0], [0], [1], [0, 0, 1, 1], [], []>} : vector<160x64xf32>, vector<64x5xf32>, vector<160x5xf32> -> vector<160x5xf32>
    %c0_3 = arith.constant 0 : index
    %c0_4 = arith.constant 0 : index
    %8 = vector.load %arg3[%c0_3, %c0_4] : memref<160x5xf32, #tpu.memory_space<vmem>>, vector<160x5xf32>
    tpu.vector_store %arg3[%c0_3, %c0_4], %7 {strides = array<i32>} : memref<160x5xf32, #tpu.memory_space<vmem>>, vector<160x5xf32>,
    return
  }
  func.func @transform_0(%arg0: i32) -> (i32, i32) {
    %c0_i32 = arith.constant 0 : i32
    %c0_i32_0 = arith.constant 0 : i32
    return %arg0, %c0_i32 : i32, i32
  }
  func.func @transform_1(%arg0: i32) -> (i32, i32) {
    %c0_i32 = arith.constant 0 : i32
    %c0_i32_0 = arith.constant 0 : i32
    %c0_i32_1 = arith.constant 0 : i32
    return %c0_i32, %c0_i32_0 : i32, i32
  }
  func.func @transform_2(%arg0: i32) -> (i32, i32) {
    %c0_i32 = arith.constant 0 : i32
    %c0_i32_0 = arith.constant 0 : i32
    return %arg0, %c0_i32 : i32, i32
  }
}

</mosaic_0001>

<llo_original>
// kernel: tpu_custom_call.1
$region0: #{tpu_custom_call.1}
  #allocation0 [shape = 'u32[]', space=smem, size = 0x4, offset = 0x4, fixed_abs, tag = 'smem constant byte address 0x4 - core index']
  #allocation1 [shape = 'u32[144,128]{1,0:T(1,128)}', space=vmem, size = 0x12000, scoped, tag = 'internal scratch']
  %s0 = inlined_call_operand.vmem [shape: s32[160,1], index: 0, kind: input, shape index: {}]
  %s1 = inlined_call_operand.vmem [shape: f32[64,5], index: 1, kind: input, shape index: {}]
  %s2 = inlined_call_operand.vmem [shape: f32[160,5], index: 2, kind: output, shape index: {}]
  %s3 = sld [smem:[#allocation0]]
  $region18: #{tpu_custom_call.1} parent=0
    _
  %s5 = ssub.s32 1, %s3
  %s6 = scalar_select 0, %s5, %s3
  // Predicated region
  $region2: #{tpu_custom_call.1} parent=0 // pred_check
    _
  $region3: #{tpu_custom_call.1} parent=0 // pred_check_branch
    %8 = sbr.rel (0) target = $region5
  $region4: #{tpu_custom_call.1} parent=0 // pred_region
    _
  $region5: #{tpu_custom_call.1} parent=0 // pred_fallthru
    _
  // Predicated region
  $region6: #{tpu_custom_call.1} parent=0 // pred_check
    _
  $region7: #{tpu_custom_call.1} parent=0 // pred_check_branch
    %10 = sbr.rel (0) target = $region9
  $region8: #{tpu_custom_call.1} parent=0 // pred_region
    _
  $region9: #{tpu_custom_call.1} parent=0 // pred_fallthru
    _
  %v11 = vld [vmem:[%s0] sm:$0xff]
  %v12 = vld [vmem:[%s0 + $0x8] sm:$0xff]
  %v13 = vld [vmem:[%s0 + $0x10] sm:$0xff]
  %v14 = vld [vmem:[%s0 + $0x18] sm:$0xff]
  %v15 = vld [vmem:[%s0 + $0x20] sm:$0xff]
  %v16 = vld [vmem:[%s0 + $0x28] sm:$0xff]
  %v17 = vld [vmem:[%s0 + $0x30] sm:$0xff]
  %v18 = vld [vmem:[%s0 + $0x38] sm:$0xff]
  %v19 = vld [vmem:[%s0 + $0x40] sm:$0xff]
  %v20 = vld [vmem:[%s0 + $0x48] sm:$0xff]
  %v21 = vld [vmem:[%s0 + $0x50] sm:$0xff]
  %v22 = vld [vmem:[%s0 + $0x58] sm:$0xff]
  %v23 = vld [vmem:[%s0 + $0x60] sm:$0xff]
  %v24 = vld [vmem:[%s0 + $0x68] sm:$0xff]
  %v25 = vld [vmem:[%s0 + $0x70] sm:$0xff]
  %v26 = vld [vmem:[%s0 + $0x78] sm:$0xff]
  %v27 = vld [vmem:[%s0 + $0x80] sm:$0xff]
  %v28 = vld [vmem:[%s0 + $0x88] sm:$0xff]
  %v29 = vld [vmem:[%s0 + $0x90] sm:$0xff]
  %v30 = vld [vmem:[%s0 + $0x98] sm:$0xff]
  %v31 = vlaneseq
  %v32 = vand.u32 %v31, 127
  %33 = vset.pattern.permute.xlu0 0
  %34 = vperm.xlu0 %33, %v11
  %v35 = vpop.permute.xlu0 %34
  %36 = vset.pattern.permute.xlu0 0
  %37 = vperm.xlu0 %36, %v12
  %v38 = vpop.permute.xlu0 %37
  %39 = vset.pattern.permute.xlu0 0
  %40 = vperm.xlu0 %39, %v13
  %v41 = vpop.permute.xlu0 %40
  %42 = vset.pattern.permute.xlu0 0
  %43 = vperm.xlu0 %42, %v14
  %v44 = vpop.permute.xlu0 %43
  %45 = vset.pattern.permute.xlu0 0
  %46 = vperm.xlu0 %45, %v15
  %v47 = vpop.permute.xlu0 %46
  %48 = vset.pattern.permute.xlu0 0
  %49 = vperm.xlu0 %48, %v16
  %v50 = vpop.permute.xlu0 %49
  %51 = vset.pattern.permute.xlu0 0
  %52 = vperm.xlu0 %51, %v17
  %v53 = vpop.permute.xlu0 %52
  %54 = vset.pattern.permute.xlu0 0
  %55 = vperm.xlu0 %54, %v18
  %v56 = vpop.permute.xlu0 %55
  %57 = vset.pattern.permute.xlu0 0
  %58 = vperm.xlu0 %57, %v19
  %v59 = vpop.permute.xlu0 %58
  %60 = vset.pattern.permute.xlu0 0
  %61 = vperm.xlu0 %60, %v20
  %v62 = vpop.permute.xlu0 %61
  %63 = vset.pattern.permute.xlu0 0
  %64 = vperm.xlu0 %63, %v21
  %v65 = vpop.permute.xlu0 %64
  %66 = vset.pattern.permute.xlu0 0
  %67 = vperm.xlu0 %66, %v22
  %v68 = vpop.permute.xlu0 %67
  %69 = vset.pattern.permute.xlu0 0
  %70 = vperm.xlu0 %69, %v23
  %v71 = vpop.permute.xlu0 %70
  %72 = vset.pattern.permute.xlu0 0
  %73 = vperm.xlu0 %72, %v24
  %v74 = vpop.permute.xlu0 %73
  %75 = vset.pattern.permute.xlu0 0
  %76 = vperm.xlu0 %75, %v25
  %v77 = vpop.permute.xlu0 %76
  %78 = vset.pattern.permute.xlu0 0
  %79 = vperm.xlu0 %78, %v26
  %v80 = vpop.permute.xlu0 %79
  %81 = vset.pattern.permute.xlu0 0
  %82 = vperm.xlu0 %81, %v27
  %v83 = vpop.permute.xlu0 %82
  %84 = vset.pattern.permute.xlu0 0
  %85 = vperm.xlu0 %84, %v28
  %v86 = vpop.permute.xlu0 %85
  %87 = vset.pattern.permute.xlu0 0
  %88 = vperm.xlu0 %87, %v29
  %v89 = vpop.permute.xlu0 %88
  %90 = vset.pattern.permute.xlu0 0
  %91 = vperm.xlu0 %90, %v30
  %v92 = vpop.permute.xlu0 %91
  %vm93 = vcmp.eq.s32.totalorder %v35, %v32
  %vm94 = vcmp.eq.s32.totalorder %v38, %v32
  %vm95 = vcmp.eq.s32.totalorder %v41, %v32
  %vm96 = vcmp.eq.s32.totalorder %v44, %v32
  %vm97 = vcmp.eq.s32.totalorder %v47, %v32
  %vm98 = vcmp.eq.s32.totalorder %v50, %v32
  %vm99 = vcmp.eq.s32.totalorder %v53, %v32
  %vm100 = vcmp.eq.s32.totalorder %v56, %v32
  %vm101 = vcmp.eq.s32.totalorder %v59, %v32
  %vm102 = vcmp.eq.s32.totalorder %v62, %v32
  %vm103 = vcmp.eq.s32.totalorder %v65, %v32
  %vm104 = vcmp.eq.s32.totalorder %v68, %v32
  %vm105 = vcmp.eq.s32.totalorder %v71, %v32
  %vm106 = vcmp.eq.s32.totalorder %v74, %v32
  %vm107 = vcmp.eq.s32.totalorder %v77, %v32
  %vm108 = vcmp.eq.s32.totalorder %v80, %v32
  %vm109 = vcmp.eq.s32.totalorder %v83, %v32
  %vm110 = vcmp.eq.s32.totalorder %v86, %v32
  %vm111 = vcmp.eq.s32.totalorder %v89, %v32
  %vm112 = vcmp.eq.s32.totalorder %v92, %v32
  %v113 = vsel %vm93, 1, 0
  %v114 = vsel %vm94, 1, 0
  %v115 = vsel %vm95, 1, 0
  %v116 = vsel %vm96, 1, 0
  %v117 = vsel %vm97, 1, 0
  %v118 = vsel %vm98, 1, 0
  %v119 = vsel %vm99, 1, 0
  %v120 = vsel %vm100, 1, 0
  %v121 = vsel %vm101, 1, 0
  %v122 = vsel %vm102, 1, 0
  %v123 = vsel %vm103, 1, 0
  %v124 = vsel %vm104, 1, 0
  %v125 = vsel %vm105, 1, 0
  %v126 = vsel %vm106, 1, 0
  %v127 = vsel %vm107, 1, 0
  %v128 = vsel %vm108, 1, 0
  %v129 = vsel %vm109, 1, 0
  %v130 = vsel %vm110, 1, 0
  %v131 = vsel %vm111, 1, 0
  %v132 = vsel %vm112, 1, 0
  %v133 = vcvt.s32.f32 %v113
  %v134 = vcvt.s32.f32 %v114
  %v135 = vcvt.s32.f32 %v115
  %v136 = vcvt.s32.f32 %v116
  %v137 = vcvt.s32.f32 %v117
  %v138 = vcvt.s32.f32 %v118
  %v139 = vcvt.s32.f32 %v119
  %v140 = vcvt.s32.f32 %v120
  %v141 = vcvt.s32.f32 %v121
  %v142 = vcvt.s32.f32 %v122
  %v143 = vcvt.s32.f32 %v123
  %v144 = vcvt.s32.f32 %v124
  %v145 = vcvt.s32.f32 %v125
  %v146 = vcvt.s32.f32 %v126
  %v147 = vcvt.s32.f32 %v127
  %v148 = vcvt.s32.f32 %v128
  %v149 = vcvt.s32.f32 %v129
  %v150 = vcvt.s32.f32 %v130
  %v151 = vcvt.s32.f32 %v131
  %v152 = vcvt.s32.f32 %v132
  %v153 = vld [vmem:[%s1] sm:$0xff]
  %v154 = vld [vmem:[%s1 + $0x8] sm:$0xff]
  %v155 = vld [vmem:[%s1 + $0x10] sm:$0xff]
  %v156 = vld [vmem:[%s1 + $0x18] sm:$0xff]
  %v157 = vld [vmem:[%s1 + $0x20] sm:$0xff]
  %v158 = vld [vmem:[%s1 + $0x28] sm:$0xff]
  %v159 = vld [vmem:[%s1 + $0x30] sm:$0xff]
  %v160 = vld [vmem:[%s1 + $0x38] sm:$0xff]
  %vm161 = vcmask 523264
  %v163 = vsel %vm161, %v133, 0
  %v166 = vsel %vm161, %v134, 0
  %v169 = vsel %vm161, %v135, 0
  %v172 = vsel %vm161, %v136, 0
  %v175 = vsel %vm161, %v137, 0
  %v178 = vsel %vm161, %v138, 0
  %v181 = vsel %vm161, %v139, 0
  %v184 = vsel %vm161, %v140, 0
  %v187 = vsel %vm161, %v141, 0
  %v190 = vsel %vm161, %v142, 0
  %v193 = vsel %vm161, %v143, 0
  %v196 = vsel %vm161, %v144, 0
  %v199 = vsel %vm161, %v145, 0
  %v202 = vsel %vm161, %v146, 0
  %v205 = vsel %vm161, %v147, 0
  %v208 = vsel %vm161, %v148, 0
  %v211 = vsel %vm161, %v149, 0
  %v214 = vsel %vm161, %v150, 0
  %v217 = vsel %vm161, %v151, 0
  %v220 = vsel %vm161, %v152, 0
  %222 = vmatprep.subr.mxu0 0.0
  %223 = vmatpush1.msra.mxu0 %v153
  %224 = vmatprep.subr.mxu0 0.0
  %225 = vmatpush1.msra.mxu0 %v154
  %226 = vmatprep.subr.mxu0 0.0
  %227 = vmatpush1.msra.mxu0 %v155
  %228 = vmatprep.subr.mxu0 0.0
  %229 = vmatpush1.msra.mxu0 %v156
  %230 = vmatprep.subr.mxu0 0.0
  %231 = vmatpush1.msra.mxu0 %v157
  %232 = vmatprep.subr.mxu0 0.0
  %233 = vmatpush1.msra.mxu0 %v158
  %234 = vmatprep.subr.mxu0 0.0
  %235 = vmatpush1.msra.mxu0 %v159
  %236 = vmatprep.subr.mxu0 0.0
  %237 = vmatpush1.msra.mxu0 %v160
  %238 = vmatprep.subr.mxu0 0.0
  %239 = vmatpush1.msra.mxu0 0.0
  %240 = vmatprep.subr.mxu0 0.0
  %241 = vmatpush1.msra.mxu0 0.0
  %242 = vmatprep.subr.mxu0 0.0
  %243 = vmatpush1.msra.mxu0 0.0
  %244 = vmatprep.subr.mxu0 0.0
  %245 = vmatpush1.msra.mxu0 0.0
  %246 = vmatprep.subr.mxu0 0.0
  %247 = vmatpush1.msra.mxu0 0.0
  %248 = vmatprep.subr.mxu0 0.0
  %249 = vmatpush1.msra.mxu0 0.0
  %250 = vmatprep.subr.mxu0 0.0
  %251 = vmatpush1.msra.mxu0 0.0
  %252 = vmatprep.subr.mxu0 0.0
  %253 = vmatpush1.msra.mxu0 0.0
  %254 = vmatprep.subr.mxu0 0.0
  %255 = vmatpush1.msra.mxu0 0.0
  %256 = vmatprep.subr.mxu0 0.0
  %257 = vmatpush1.msra.mxu0 0.0
  %258 = vmatprep.subr.mxu0 0.0
  %259 = vmatpush1.msra.mxu0 0.0
  %260 = vmatprep.subr.mxu0 0.0
  %261 = vmatpush1.msra.mxu0 0.0
  %262 = vmatprep.subr.mxu0 0.0
  %263 = vmatpush1.msra.mxu0 0.0
  %264 = vmatprep.subr.mxu0 0.0
  %265 = vmatpush1.msra.mxu0 0.0
  %266 = vmatprep.subr.mxu0 0.0
  %267 = vmatpush1.msra.mxu0 0.0
  %268 = vmatprep.subr.mxu0 0.0
  %269 = vmatpush1.msra.mxu0 0.0
  %270 = vmatprep.subr.mxu0 0.0
  %271 = vmatpush1.msra.mxu0 0.0
  %272 = vmatprep.subr.mxu0 0.0
  %273 = vmatpush1.msra.mxu0 0.0
  %274 = vmatprep.subr.mxu0 0.0
  %275 = vmatpush1.msra.mxu0 0.0
  %276 = vmatprep.subr.mxu0 0.0
  %277 = vmatpush1.msra.mxu0 0.0
  %278 = vmatprep.subr.mxu0 0.0
  %279 = vmatpush1.msra.mxu0 0.0
  %280 = vmatprep.subr.mxu0 0.0
  %281 = vmatpush1.msra.mxu0 0.0
  %282 = vmatprep.subr.mxu0 0.0
  %283 = vmatpush1.msra.mxu0 0.0
  %284 = vmatprep.subr.mxu0 0.0
  %285 = vmatpush1.msra.mxu0 0.0
  %286 = vmatprep.mubr.f32.mxu0 0.0
  %287 = vmatmul.mubr.f32.gmra.mrb[0].mxu0 %v163
  %v288 = vpop.f32.mrb[0].mxu0
  %v289 = vadd.f32 0.0, %v288
  %v290 = vpop.f32.mrb[0].mxu0
  %291 = vmatprep.mubr.f32.mxu0 0.0
  %292 = vmatmul.mubr.f32.gmra.mrb[0].mxu0 %v166
  %v293 = vpop.f32.mrb[0].mxu0
  %v294 = vadd.f32 0.0, %v293
  %v295 = vpop.f32.mrb[0].mxu0
  %296 = vmatprep.mubr.f32.mxu0 0.0
  %297 = vmatmul.mubr.f32.gmra.mrb[0].mxu0 %v169
  %v298 = vpop.f32.mrb[0].mxu0
  %v299 = vadd.f32 0.0, %v298
  %v300 = vpop.f32.mrb[0].mxu0
  %301 = vmatprep.mubr.f32.mxu0 0.0
  %302 = vmatmul.mubr.f32.gmra.mrb[0].mxu0 %v172
  %v303 = vpop.f32.mrb[0].mxu0
  %v304 = vadd.f32 0.0, %v303
  %v305 = vpop.f32.mrb[0].mxu0
  %306 = vmatprep.mubr.f32.mxu0 0.0
  %307 = vmatmul.mubr.f32.gmra.mrb[0].mxu0 %v175
  %v308 = vpop.f32.mrb[0].mxu0
  %v309 = vadd.f32 0.0, %v308
  %v310 = vpop.f32.mrb[0].mxu0
  %311 = vmatprep.mubr.f32.mxu0 0.0
  %312 = vmatmul.mubr.f32.gmra.mrb[0].mxu0 %v178
  %v313 = vpop.f32.mrb[0].mxu0
  %v314 = vadd.f32 0.0, %v313
  %v315 = vpop.f32.mrb[0].mxu0
  %316 = vmatprep.mubr.f32.mxu0 0.0
  %317 = vmatmul.mubr.f32.gmra.mrb[0].mxu0 %v181
  %v318 = vpop.f32.mrb[0].mxu0
  %v319 = vadd.f32 0.0, %v318
  %v320 = vpop.f32.mrb[0].mxu0
  %321 = vmatprep.mubr.f32.mxu0 0.0
  %322 = vmatmul.mubr.f32.gmra.mrb[0].mxu0 %v184
  %v323 = vpop.f32.mrb[0].mxu0
  %v324 = vadd.f32 0.0, %v323
  %v325 = vpop.f32.mrb[0].mxu0
  %326 = vmatprep.mubr.f32.mxu0 0.0
  %327 = vmatmul.mubr.f32.gmra.mrb[0].mxu0 %v187
  %v328 = vpop.f32.mrb[0].mxu0
  %v329 = vadd.f32 0.0, %v328
  %v330 = vpop.f32.mrb[0].mxu0
  %331 = vmatprep.mubr.f32.mxu0 0.0
  %332 = vmatmul.mubr.f32.gmra.mrb[0].mxu0 %v190
  %v333 = vpop.f32.mrb[0].mxu0
  %v334 = vadd.f32 0.0, %v333
  %v335 = vpop.f32.mrb[0].mxu0
  %336 = vmatprep.mubr.f32.mxu0 0.0
  %337 = vmatmul.mubr.f32.gmra.mrb[0].mxu0 %v193
  %v338 = vpop.f32.mrb[0].mxu0
  %v339 = vadd.f32 0.0, %v338
  %v340 = vpop.f32.mrb[0].mxu0
  %341 = vmatprep.mubr.f32.mxu0 0.0
  %342 = vmatmul.mubr.f32.gmra.mrb[0].mxu0 %v196
  %v343 = vpop.f32.mrb[0].mxu0
  %v344 = vadd.f32 0.0, %v343
  %v345 = vpop.f32.mrb[0].mxu0
  %346 = vmatprep.mubr.f32.mxu0 0.0
  %347 = vmatmul.mubr.f32.gmra.mrb[0].mxu0 %v199
  %v348 = vpop.f32.mrb[0].mxu0
  %v349 = vadd.f32 0.0, %v348
  %v350 = vpop.f32.mrb[0].mxu0
  %351 = vmatprep.mubr.f32.mxu0 0.0
  %352 = vmatmul.mubr.f32.gmra.mrb[0].mxu0 %v202
  %v353 = vpop.f32.mrb[0].mxu0
  %v354 = vadd.f32 0.0, %v353
  %v355 = vpop.f32.mrb[0].mxu0
  %356 = vmatprep.mubr.f32.mxu0 0.0
  %357 = vmatmul.mubr.f32.gmra.mrb[0].mxu0 %v205
  %v358 = vpop.f32.mrb[0].mxu0
  %v359 = vadd.f32 0.0, %v358
  %v360 = vpop.f32.mrb[0].mxu0
  %361 = vmatprep.mubr.f32.mxu0 0.0
  %362 = vmatmul.mubr.f32.gmra.mrb[0].mxu0 %v208
  %v363 = vpop.f32.mrb[0].mxu0
  %v364 = vadd.f32 0.0, %v363
  %v365 = vpop.f32.mrb[0].mxu0
  %366 = vmatprep.mubr.f32.mxu0 0.0
  %367 = vmatmul.mubr.f32.gmra.mrb[0].mxu0 %v211
  %v368 = vpop.f32.mrb[0].mxu0
  %v369 = vadd.f32 0.0, %v368
  %v370 = vpop.f32.mrb[0].mxu0
  %371 = vmatprep.mubr.f32.mxu0 0.0
  %372 = vmatmul.mubr.f32.gmra.mrb[0].mxu0 %v214
  %v373 = vpop.f32.mrb[0].mxu0
  %v374 = vadd.f32 0.0, %v373
  %v375 = vpop.f32.mrb[0].mxu0
  %376 = vmatprep.mubr.f32.mxu0 0.0
  %377 = vmatmul.mubr.f32.gmra.mrb[0].mxu0 %v217
  %v378 = vpop.f32.mrb[0].mxu0
  %v379 = vadd.f32 0.0, %v378
  %v380 = vpop.f32.mrb[0].mxu0
  %381 = vmatprep.mubr.f32.mxu0 0.0
  %382 = vmatmul.mubr.f32.gmra.mrb[0].mxu0 %v220
  %v383 = vpop.f32.mrb[0].mxu0
  %v384 = vadd.f32 0.0, %v383
  %v385 = vpop.f32.mrb[0].mxu0
  %386 = vdwg.mxu0
  %vm387 = vcmask 39936
  %388 = vst.msk [vmem:[%s2] sm:$0xff] %vm387, %v289
  %389 = vst.msk [vmem:[%s2 + $0x8] sm:$0xff] %vm387, %v294
  %390 = vst.msk [vmem:[%s2 + $0x10] sm:$0xff] %vm387, %v299
  %391 = vst.msk [vmem:[%s2 + $0x18] sm:$0xff] %vm387, %v304
  %392 = vst.msk [vmem:[%s2 + $0x20] sm:$0xff] %vm387, %v309
  %393 = vst.msk [vmem:[%s2 + $0x28] sm:$0xff] %vm387, %v314
  %394 = vst.msk [vmem:[%s2 + $0x30] sm:$0xff] %vm387, %v319
  %395 = vst.msk [vmem:[%s2 + $0x38] sm:$0xff] %vm387, %v324
  %396 = vst.msk [vmem:[%s2 + $0x40] sm:$0xff] %vm387, %v329
  %397 = vst.msk [vmem:[%s2 + $0x48] sm:$0xff] %vm387, %v334
  %398 = vst.msk [vmem:[%s2 + $0x50] sm:$0xff] %vm387, %v339
  %399 = vst.msk [vmem:[%s2 + $0x58] sm:$0xff] %vm387, %v344
  %400 = vst.msk [vmem:[%s2 + $0x60] sm:$0xff] %vm387, %v349
  %401 = vst.msk [vmem:[%s2 + $0x68] sm:$0xff] %vm387, %v354
  %402 = vst.msk [vmem:[%s2 + $0x70] sm:$0xff] %vm387, %v359
  %403 = vst.msk [vmem:[%s2 + $0x78] sm:$0xff] %vm387, %v364
  %404 = vst.msk [vmem:[%s2 + $0x80] sm:$0xff] %vm387, %v369
  %405 = vst.msk [vmem:[%s2 + $0x88] sm:$0xff] %vm387, %v374
  %406 = vst.msk [vmem:[%s2 + $0x90] sm:$0xff] %vm387, %v379
  %407 = vst.msk [vmem:[%s2 + $0x98] sm:$0xff] %vm387, %v384
  // Predicated region
  $region10: #{tpu_custom_call.1} parent=0 // pred_check
    _
  $region11: #{tpu_custom_call.1} parent=0 // pred_check_branch
    %409 = sbr.rel (0) target = $region13
  $region12: #{tpu_custom_call.1} parent=0 // pred_region
    _
  $region13: #{tpu_custom_call.1} parent=0 // pred_fallthru
    _
  // Predicated region
  $region14: #{tpu_custom_call.1} parent=0 // pred_check
    _
  $region15: #{tpu_custom_call.1} parent=0 // pred_check_branch
    %411 = sbr.rel (0) target = $region17
  $region16: #{tpu_custom_call.1} parent=0 // pred_region
    _
  $region17: #{tpu_custom_call.1} parent=0 // pred_fallthru
    _

</llo_original>
